<compile_context>
chip_gen: v5e
topology: v5e:2x2
jax: 0.10.0
libtpu: 0.0.40
codegen_flags: <defaults>
</compile_context>

<pallas_src>
import jax
import jax.numpy as jnp
from jax.experimental import pallas as pl
from jax.experimental.pallas import tpu as pltpu

HIDDEN = 8    # fc1 output width, fixed by the module definition
LANE = 128    # TPU lane width


def _round_up(n, m):
    return ((n + m - 1) // m) * m


def fnn_kernel(x_ref, w1_ref, b1_ref, w2_ref, b2_ref, o_ref):
    # fc1: [TB, D] @ [D, H] + [1, H], ReLU
    h = jnp.dot(x_ref[...], w1_ref[...], preferred_element_type=jnp.float32)
    h = jnp.maximum(h + b1_ref[...], 0.0)
    # fc2: [TB, H] @ [H, C_pad] + [1, C_pad]
    y = jnp.dot(h, w2_ref[...], preferred_element_type=jnp.float32)
    o_ref[...] = (y + b2_ref[...]).astype(o_ref.dtype)


def fnn_forward(x, w1, b1, w2, b2, *, tile_b=1024):
    """x: [B, D]; w1: [D, 8]; b1: [1, 8]; w2: [8, C]; b2: [1, C] -> [B, C]."""
    B, D = x.shape
    H = w1.shape[1]
    C = w2.shape[1]

    # --- lane-dense output: pad num_class to a multiple of 128 lanes ---
    c_pad = _round_up(max(C, LANE), LANE)
    w2p = jnp.zeros((H, c_pad), w2.dtype).at[:, :C].set(w2)
    b2p = jnp.zeros((1, c_pad), b2.dtype).at[:, :C].set(b2)

    # --- batch tiling: clamp tile to (padded) batch, pad batch to a multiple ---
    tb = min(tile_b, _round_up(B, 8))
    b_pad = _round_up(B, tb)
    if b_pad != B:
        xp = jnp.zeros((b_pad, D), x.dtype).at[:B].set(x)
    else:
        xp = x

    grid = (b_pad // tb,)

    y = pl.pallas_call(
        fnn_kernel,
        out_shape=jax.ShapeDtypeStruct((b_pad, c_pad), x.dtype),
        grid=grid,
        in_specs=[
            pl.BlockSpec((tb, D), lambda i: (i, 0)),       # x: tiled over batch
            pl.BlockSpec((D, H), lambda i: (0, 0)),        # w1: resident
            pl.BlockSpec((1, H), lambda i: (0, 0)),        # b1: resident
            pl.BlockSpec((H, c_pad), lambda i: (0, 0)),    # w2 (padded): resident
            pl.BlockSpec((1, c_pad), lambda i: (0, 0)),    # b2 (padded): resident
        ],
        out_specs=pl.BlockSpec((tb, c_pad), lambda i: (i, 0)),
        compiler_params=pltpu.CompilerParams(
            dimension_semantics=("parallel",),
            vmem_limit_bytes=32 * 1024 * 1024,
        ),
    )(xp, w1, b1, w2p, b2p)

    return y[:B, :C]


def init_params(key, input_dim, num_class):
    """Deterministic init mimicking nn.Linear's U(-1/sqrt(fan_in), 1/sqrt(fan_in))."""
    k1, k2, k3, k4 = jax.random.split(key, 4)
    bound1 = 1.0 / jnp.sqrt(float(input_dim))
    bound2 = 1.0 / jnp.sqrt(float(HIDDEN))
    w1 = jax.random.uniform(k1, (input_dim, HIDDEN), jnp.float32, -bound1, bound1)
    b1 = jax.random.uniform(k2, (1, HIDDEN), jnp.float32, -bound1, bound1)
    w2 = jax.random.uniform(k3, (HIDDEN, num_class), jnp.float32, -bound2, bound2)
    b2 = jax.random.uniform(k4, (1, num_class), jnp.float32, -bound2, bound2)
    return w1, b1, w2, b2


def _reference(x, w1, b1, w2, b2):
    h = jnp.maximum(x @ w1 + b1, 0.0)
    return h @ w2 + b2


if __name__ == "__main__":
    key = jax.random.PRNGKey(0)
    batch, input_dim, num_class = 4, 16, 3

    kx, kp = jax.random.split(key)
    x = jax.random.normal(kx, (batch, input_dim), jnp.float32)
    w1, b1, w2, b2 = init_params(kp, input_dim, num_class)

    # Small-shape run (single grid step, padded tail rows + padded lanes).
    y = fnn_forward(x, w1, b1, w2, b2)
    jax.block_until_ready(y)
    y_ref = _reference(x, w1, b1, w2, b2)
    assert y.shape == (batch, num_class)
    assert jnp.allclose(y, y_ref, atol=1e-5, rtol=1e-5)

    # Multi-step grid check: non-multiple batch with a small tile to exercise
    # the pipelined grid and tail padding/un-padding paths.
    x2 = jax.random.normal(jax.random.PRNGKey(1), (20, input_dim), jnp.float32)
    y2 = fnn_forward(x2, w1, b1, w2, b2, tile_b=8)
    jax.block_until_ready(y2)
    y2_ref = _reference(x2, w1, b1, w2, b2)
    assert y2.shape == (20, num_class)
    assert jnp.allclose(y2, y2_ref, atol=1e-5, rtol=1e-5)

    print("KERNEL_OK")
</pallas_src>

<mosaic_0001>
module attributes {stable_mosaic.version = 11 : i64} {
  func.func @fnn_kernel(%arg0: i32, %arg1: memref<8x16xf32, #tpu.memory_space<vmem>>, %arg2: memref<16x8xf32, #tpu.memory_space<vmem>>, %arg3: memref<1x8xf32, #tpu.memory_space<vmem>>, %arg4: memref<8x128xf32, #tpu.memory_space<vmem>>, %arg5: memref<1x128xf32, #tpu.memory_space<vmem>>, %arg6: memref<8x128xf32, #tpu.memory_space<vmem>>) attributes {dimension_semantics = [#tpu.dimension_semantics<parallel>], iteration_bounds = array<i64: 1>, scalar_prefetch = 0 : i64, scratch_operands = 0 : i64, tpu.core_type = #tpu.core_type<tc>, window_params = [{transform_indices = @transform_0, window_bounds = array<i64: 8, 16>}, {pipeline_mode = #tpu.pipeline_mode<synchronous>, transform_indices = @transform_1, window_bounds = array<i64: 16, 8>}, {pipeline_mode = #tpu.pipeline_mode<synchronous>, transform_indices = @transform_2, window_bounds = array<i64: 1, 8>}, {pipeline_mode = #tpu.pipeline_mode<synchronous>, transform_indices = @transform_3, window_bounds = array<i64: 8, 128>}, {pipeline_mode = #tpu.pipeline_mode<synchronous>, transform_indices = @transform_4, window_bounds = array<i64: 1, 128>}, {transform_indices = @transform_5, window_bounds = array<i64: 8, 128>}]} {
    %c0 = arith.constant 0 : index
    %c0_0 = arith.constant 0 : index
    %0 = vector.load %arg1[%c0, %c0_0] : memref<8x16xf32, #tpu.memory_space<vmem>>, vector<8x16xf32>
    %c0_1 = arith.constant 0 : index
    %c0_2 = arith.constant 0 : index
    %1 = vector.load %arg2[%c0_1, %c0_2] : memref<16x8xf32, #tpu.memory_space<vmem>>, vector<16x8xf32>
    %cst = arith.constant dense<0.000000e+00> : vector<8x8xf32>
    %2 = tpu.matmul %0, %1, %cst {dimension_numbers = #tpu.dot_dimension_numbers<[1], [0], [0], [1], [0, 0, 1, 1], [], []>} : vector<8x16xf32>, vector<16x8xf32>, vector<8x8xf32> -> vector<8x8xf32>
    %c0_3 = arith.constant 0 : index
    %c0_4 = arith.constant 0 : index
    %3 = vector.load %arg3[%c0_3, %c0_4] : memref<1x8xf32, #tpu.memory_space<vmem>>, vector<1x8xf32>
    %4 = vector.broadcast %3 : vector<1x8xf32> to vector<8x8xf32>
    %5 = arith.addf %2, %4 : vector<8x8xf32>
    %cst_5 = arith.constant 0.000000e+00 : f32
    %6 = vector.broadcast %cst_5 : f32 to vector<8x8xf32>
    %7 = arith.maximumf %5, %6 : vector<8x8xf32>
    %c0_6 = arith.constant 0 : index
    %c0_7 = arith.constant 0 : index
    %8 = vector.load %arg4[%c0_6, %c0_7] : memref<8x128xf32, #tpu.memory_space<vmem>>, vector<8x128xf32>
    %cst_8 = arith.constant dense<0.000000e+00> : vector<8x128xf32>
    %9 = tpu.matmul %7, %8, %cst_8 {dimension_numbers = #tpu.dot_dimension_numbers<[1], [0], [0], [1], [0, 0, 1, 1], [], []>} : vector<8x8xf32>, vector<8x128xf32>, vector<8x128xf32> -> vector<8x128xf32>
    %c0_9 = arith.constant 0 : index
    %c0_10 = arith.constant 0 : index
    %10 = vector.load %arg5[%c0_9, %c0_10] : memref<1x128xf32, #tpu.memory_space<vmem>>, vector<1x128xf32>
    %11 = vector.broadcast %10 : vector<1x128xf32> to vector<8x128xf32>
    %12 = arith.addf %9, %11 : vector<8x128xf32>
    %c0_11 = arith.constant 0 : index
    %c0_12 = arith.constant 0 : index
    %13 = vector.load %arg6[%c0_11, %c0_12] : memref<8x128xf32, #tpu.memory_space<vmem>>, vector<8x128xf32>
    tpu.vector_store %arg6[%c0_11, %c0_12], %12 {strides = array<i32>} : memref<8x128xf32, #tpu.memory_space<vmem>>, vector<8x128xf32>,
    return
  }
  func.func @transform_0(%arg0: i32) -> (i32, i32) {
    %c0_i32 = arith.constant 0 : i32
    %c0_i32_0 = arith.constant 0 : i32
    return %arg0, %c0_i32 : i32, i32
  }
  func.func @transform_1(%arg0: i32) -> (i32, i32) {
    %c0_i32 = arith.constant 0 : i32
    %c0_i32_0 = arith.constant 0 : i32
    %c0_i32_1 = arith.constant 0 : i32
    return %c0_i32, %c0_i32_0 : i32, i32
  }
  func.func @transform_2(%arg0: i32) -> (i32, i32) {
    %c0_i32 = arith.constant 0 : i32
    %c0_i32_0 = arith.constant 0 : i32
    %c0_i32_1 = arith.constant 0 : i32
    return %c0_i32, %c0_i32_0 : i32, i32
  }
  func.func @transform_3(%arg0: i32) -> (i32, i32) {
    %c0_i32 = arith.constant 0 : i32
    %c0_i32_0 = arith.constant 0 : i32
    %c0_i32_1 = arith.constant 0 : i32
    return %c0_i32, %c0_i32_0 : i32, i32
  }
  func.func @transform_4(%arg0: i32) -> (i32, i32) {
    %c0_i32 = arith.constant 0 : i32
    %c0_i32_0 = arith.constant 0 : i32
    %c0_i32_1 = arith.constant 0 : i32
    return %c0_i32, %c0_i32_0 : i32, i32
  }
  func.func @transform_5(%arg0: i32) -> (i32, i32) {
    %c0_i32 = arith.constant 0 : i32
    %c0_i32_0 = arith.constant 0 : i32
    return %arg0, %c0_i32 : i32, i32
  }
}

</mosaic_0001>

<llo_original>
// kernel: tpu_custom_call.1
$region0: #{tpu_custom_call.1}
  #allocation0 [shape = 'u32[]', space=smem, size = 0x4, offset = 0x4, fixed_abs, tag = 'smem constant byte address 0x4 - core index']
  #allocation1 [shape = 'u32[72,128]{1,0:T(1,128)}', space=vmem, size = 0x9000, scoped, tag = 'internal scratch']
  %s0 = inlined_call_operand.vmem [shape: f32[8,16], index: 0, kind: input, shape index: {}]
  %s1 = inlined_call_operand.vmem [shape: f32[16,8], index: 1, kind: input, shape index: {}]
  %s2 = inlined_call_operand.vmem [shape: f32[1,8], index: 2, kind: input, shape index: {}]
  %s3 = inlined_call_operand.vmem [shape: f32[8,128], index: 3, kind: input, shape index: {}]
  %s4 = inlined_call_operand.vmem [shape: f32[1,128], index: 4, kind: input, shape index: {}]
  %s5 = inlined_call_operand.hbm [shape: f32[8,128], index: 5, kind: output, shape index: {}]
  %s6 = sld [smem:[#allocation0]]
  $region30: #{tpu_custom_call.1} parent=0
    _
  %s8 = ssub.s32 1, %s6
  %s9 = scalar_select 0, %s8, %s6
  $region1: #{tpu_custom_call.1} parent=0
    #allocation2 [shape = 'u8[4096]{0}', space=vmem, size = 0x1000, scoped, tag = 'output window, operand 0, single buffered']
    #allocation3 [shape = 's32[1]{0}', space=sflag, size = 0x4, scoped, tag = 'scoped memory for tpu_custom_call.1']
    %10 = vsyncpa [#allocation3], 0
    // Predicated region
    $region2: #{tpu_custom_call.1} parent=1 // pred_check
      _
    $region3: #{tpu_custom_call.1} parent=1 // pred_check_branch
      %12 = sbr.rel (0) target = $region5
    $region4: #{tpu_custom_call.1} parent=1 // pred_region
      _
    $region5: #{tpu_custom_call.1} parent=1 // pred_fallthru
      _
    // Predicated region
    $region6: #{tpu_custom_call.1} parent=1 // pred_check
      _
    $region7: #{tpu_custom_call.1} parent=1 // pred_check_branch
      %14 = sbr.rel (0) target = $region9
    $region8: #{tpu_custom_call.1} parent=1 // pred_region
      _
    $region9: #{tpu_custom_call.1} parent=1 // pred_fallthru
      _
    // Predicated region
    $region10: #{tpu_custom_call.1} parent=1 // pred_check
      _
    $region11: #{tpu_custom_call.1} parent=1 // pred_check_branch
      %16 = sbr.rel (0) target = $region13
    $region12: #{tpu_custom_call.1} parent=1 // pred_region
      _
    $region13: #{tpu_custom_call.1} parent=1 // pred_fallthru
      _
    // Predicated region
    $region14: #{tpu_custom_call.1} parent=1 // pred_check
      _
    $region15: #{tpu_custom_call.1} parent=1 // pred_check_branch
      %18 = sbr.rel (0) target = $region17
    $region16: #{tpu_custom_call.1} parent=1 // pred_region
      _
    $region17: #{tpu_custom_call.1} parent=1 // pred_fallthru
      _
    // Predicated region
    $region18: #{tpu_custom_call.1} parent=1 // pred_check
      _
    $region19: #{tpu_custom_call.1} parent=1 // pred_check_branch
      %20 = sbr.rel (0) target = $region21
    $region20: #{tpu_custom_call.1} parent=1 // pred_region
      _
    $region21: #{tpu_custom_call.1} parent=1 // pred_fallthru
      _
    %v21 = vld [vmem:[%s0] sm:$0xff]
    %v22 = vld [vmem:[%s1] sm:$0xff]
    %v23 = vld [vmem:[%s1 + $0x8] sm:$0xff]
    %v24 = vld [vmem:[%s2] sm:$0x1]
    %v26 = vperm.slane %v24, 0
    %vm28 = vcmask 130048
    %v30 = vsel %vm28, %v21, 0
    %32 = vmatpush.msra.mxu0 0.0
    %33 = vmatpush.msra.mxu0 0.0
    %34 = vmatpush.msra.mxu0 0.0
    %35 = vmatpush.msra.mxu0 0.0
    %36 = vmatpush.msra.mxu0 0.0
    %37 = vmatpush.msra.mxu0 0.0
    %38 = vmatpush.msra.mxu0 0.0
    %39 = vmatpush.msra.mxu0 0.0
    %40 = vmatpush.msra.mxu0 0.0
    %41 = vmatpush.msra.mxu0 0.0
    %42 = vmatpush.msra.mxu0 0.0
    %43 = vmatpush.msra.mxu0 0.0
    %44 = vmatpush.msra.mxu0 0.0
    %45 = vmatpush.msra.mxu0 0.0
    %46 = vmatpush.msra.mxu0 %v23
    %47 = vmatpush.msra.mxu0 %v22
    %48 = vmatmul.f32.gmra.mxu0 %v30
    %v49 = vpop.f32.mrf.mxu0
    %v50 = vadd.f32 %v26, %v49
    %51 = vdwg.mxu0
    %v52 = vmax.f32 %v50, 0.0
    %v53 = vld [vmem:[%s3] sm:$0xff]
    %v54 = vld [vmem:[%s4] sm:$0x1]
    %v56 = vperm.slane %v54, 0
    %vm58 = vcmask 64512
    %v60 = vsel %vm58, %v52, 0
    %62 = vmatpush.msra.mxu0 0.0
    %63 = vmatpush.msra.mxu0 0.0
    %64 = vmatpush.msra.mxu0 0.0
    %65 = vmatpush.msra.mxu0 0.0
    %66 = vmatpush.msra.mxu0 0.0
    %67 = vmatpush.msra.mxu0 0.0
    %68 = vmatpush.msra.mxu0 0.0
    %69 = vmatpush.msra.mxu0 0.0
    %70 = vmatpush.msra.mxu0 0.0
    %71 = vmatpush.msra.mxu0 0.0
    %72 = vmatpush.msra.mxu0 0.0
    %73 = vmatpush.msra.mxu0 0.0
    %74 = vmatpush.msra.mxu0 0.0
    %75 = vmatpush.msra.mxu0 0.0
    %76 = vmatpush.msra.mxu0 0.0
    %77 = vmatpush.msra.mxu0 %v53
    %78 = vmatmul.f32.gmra.mxu0 %v60
    %v79 = vpop.f32.mrf.mxu0
    %v80 = vadd.f32 %v56, %v79
    %81 = vdwg.mxu0
    %82 = vst [vmem:[#allocation2] sm:$0xff] %v80
    // Predicated region
    $region22: #{tpu_custom_call.1} parent=1 // pred_check
      _
    $region23: #{tpu_custom_call.1} parent=1 // pred_check_branch
      %84 = sbr.rel (0) target = $region25
    $region24: #{tpu_custom_call.1} parent=1 // pred_region
      %86 = vsyncadd [#allocation3], 0
      %s88 = sshll.u32 [#allocation2], 4
      %s89 = int_to_ptr.vmem [resolvable:$true] %s88
      %s90 = sshll.u32 %s5, 4
      %s91 = int_to_ptr.hbm [resolvable:$true] %s90
      %93 = dma.vmem_to_hbm [thread:$0]  %s89, 128, %s91, [#allocation3]
    $region25: #{tpu_custom_call.1} parent=1 // pred_fallthru
      _
    // Predicated region
    $region26: #{tpu_custom_call.1} parent=1 // pred_check
      _
    $region27: #{tpu_custom_call.1} parent=1 // pred_check_branch
      %95 = sbr.rel (0) target = $region29
    $region28: #{tpu_custom_call.1} parent=1 // pred_region
      %97 = dma.done [#allocation3], 128
    $region29: #{tpu_custom_call.1} parent=1 // pred_fallthru
      _
    %98 = vsyncpa [#allocation3], 1

</llo_original>
